<compile_context>
chip_gen: v5e
topology: v5e:2x2
jax: 0.10.0
libtpu: 0.0.40
codegen_flags: <defaults>
</compile_context>

<pallas_src>
import functools

import jax
import jax.numpy as jnp
from jax import lax
from jax.experimental import pallas as pl
from jax.experimental.pallas import tpu as pltpu


# ------------------------------ fused kernel --------------------------------

def _mha_kernel(h, d_k, B, S, self_attn, return_attn, use_bf16, *refs):
    d_model = h * d_k
    M = B * S
    mm_dtype = jnp.bfloat16 if use_bf16 else jnp.float32

    if self_attn:
        x_ref, wqkv_ref, bqkv_ref, wo_ref, bo_ref = refs[:5]
        rest = refs[5:]
    else:
        xq_ref, xk_ref, xv_ref, wqkv_ref, bqkv_ref, wo_ref, bo_ref = refs[:7]
        rest = refs[7:]
    if return_attn:
        out_ref, attn_ref, ctx_ref = rest
    else:
        out_ref, ctx_ref = rest
        attn_ref = None

    def linear_nt(x2d, w, b):
        """x2d: (M, K); w: (N, K) [PyTorch Linear layout]; b: (1, N) -> (M, N).

        Contracts K against K via dot_general (no transpose materialized);
        optional bf16 operands, always f32 accumulation; bias added in f32.
        """
        y = lax.dot_general(
            x2d.astype(mm_dtype), w.astype(mm_dtype),
            dimension_numbers=(((1,), (1,)), ((), ())),
            preferred_element_type=jnp.float32)
        return y + b

    # ---- Q/K/V projections: one fused matmul if self-attention. ----
    if self_attn:
        x2d = x_ref[...].reshape(M, d_model)
        qkv = linear_nt(x2d, wqkv_ref[...], bqkv_ref[...])        # (M, 3*d_model)
        q2 = qkv[:, 0:d_model]
        k2 = qkv[:, d_model:2 * d_model]
        v2 = qkv[:, 2 * d_model:3 * d_model]
    else:
        wqkv = wqkv_ref[...]
        bqkv = bqkv_ref[...]
        q2 = linear_nt(xq_ref[...].reshape(M, d_model),
                       wqkv[0:d_model, :], bqkv[:, 0:d_model])
        k2 = linear_nt(xk_ref[...].reshape(M, d_model),
                       wqkv[d_model:2 * d_model, :], bqkv[:, d_model:2 * d_model])
        v2 = linear_nt(xv_ref[...].reshape(M, d_model),
                       wqkv[2 * d_model:3 * d_model, :], bqkv[:, 2 * d_model:3 * d_model])

    q3 = q2.reshape(B, S, d_model)
    k3 = k2.reshape(B, S, d_model)
    v3 = v2.reshape(B, S, d_model)

    # ---- Per-head attention, batched over B on the MXU. ----
    for head in range(h):
        lo = head * d_k
        q_h = q3[:, :, lo:lo + d_k]          # (B, S, d_k)
        k_h = k3[:, :, lo:lo + d_k]
        v_h = v3[:, :, lo:lo + d_k]

        # scores = q_h @ k_h^T per batch element.
        # NOTE: no 1/sqrt(d_k) -- scaling=True is neither 'yes' nor 'learned'.
        s = jnp.einsum('bqd,bkd->bqk',
                       q_h.astype(mm_dtype), k_h.astype(mm_dtype),
                       preferred_element_type=jnp.float32)        # (B, S, S)

        m = jnp.max(s, axis=-1, keepdims=True)
        e = jnp.exp(s - m)
        l = jnp.sum(e, axis=-1, keepdims=True)
        p = e * pl.reciprocal(l, approx=True)                     # EUP reciprocal

        if attn_ref is not None:
            # Exact normalization for externally consumed attention maps.
            attn_ref[:, head] = (e / l).astype(attn_ref.dtype)

        # Write this head's context straight into the VMEM scratch slab
        # (already in the merged "transpose(1,2).view(B,S,h*d_k)" layout).
        ctx_ref[:, :, lo:lo + d_k] = jnp.einsum(
            'bqk,bkd->bqd', p.astype(mm_dtype), v_h.astype(mm_dtype),
            preferred_element_type=jnp.float32)

    # ---- Output projection. ----
    ctx2d = ctx_ref[...].reshape(M, d_model)
    out = linear_nt(ctx2d, wo_ref[...], bo_ref[...])
    out_ref[...] = out.reshape(B, S, d_model).astype(out_ref.dtype)


# -------------------------------- wrapper ------------------------------------

def multi_headed_attention_forward(params, query, key, value, h, d_k, *,
                                   return_attn=False, use_bf16_matmul=False,
                                   self_attention=None):
    """Fused forward of MultiHeadedAttention (scaling=True, mask=None, eval)."""
    B, S, d_model = query.shape
    assert d_model == h * d_k

    if self_attention is None:
        self_attention = (key is query) and (value is query)

    # One-time weight/bias concat (weight-sized XLA op; can be precomputed by
    # the caller).  Biases as (1, N) rows so they broadcast in the kernel.
    wqkv = jnp.concatenate([params["wq"], params["wk"], params["wv"]], axis=0)
    bqkv = jnp.concatenate([params["bq"], params["bk"], params["bv"]]
                           ).reshape(1, 3 * d_model)
    bo = params["bo"].reshape(1, d_model)

    x_spec = pl.BlockSpec((B, S, d_model), lambda i: (0, 0, 0))
    wqkv_spec = pl.BlockSpec((3 * d_model, d_model), lambda i: (0, 0))
    bqkv_spec = pl.BlockSpec((1, 3 * d_model), lambda i: (0, 0))
    wo_spec = pl.BlockSpec((d_model, d_model), lambda i: (0, 0))
    bo_spec = pl.BlockSpec((1, d_model), lambda i: (0, 0))

    if self_attention:
        in_specs = [x_spec, wqkv_spec, bqkv_spec, wo_spec, bo_spec]
        inputs = (query, wqkv, bqkv, params["wo"], bo)
    else:
        in_specs = [x_spec, x_spec, x_spec, wqkv_spec, bqkv_spec, wo_spec, bo_spec]
        inputs = (query, key, value, wqkv, bqkv, params["wo"], bo)

    out_spec = pl.BlockSpec((B, S, d_model), lambda i: (0, 0, 0))
    out_shape = jax.ShapeDtypeStruct((B, S, d_model), query.dtype)
    if return_attn:
        out_shapes = (out_shape, jax.ShapeDtypeStruct((B, h, S, S), jnp.float32))
        out_specs = (out_spec, pl.BlockSpec((B, h, S, S), lambda i: (0, 0, 0, 0)))
    else:
        out_shapes = out_shape
        out_specs = out_spec

    kernel = functools.partial(_mha_kernel, h, d_k, B, S,
                               self_attention, return_attn, use_bf16_matmul)

    result = pl.pallas_call(
        kernel,
        out_shape=out_shapes,
        grid=(1,),                       # single step: whole problem resident
        in_specs=in_specs,
        out_specs=out_specs,
        scratch_shapes=[pltpu.VMEM((B, S, d_model), jnp.float32)],
        compiler_params=pltpu.CompilerParams(
            dimension_semantics=("arbitrary",),
            vmem_limit_bytes=48 * 1024 * 1024),
    )(*inputs)

    if return_attn:
        return result[0], result[1]
    return result, None


# ------------------------------ reference -----------------------------------

def reference_forward(params, query, key, value, h, d_k):
    B, S, d_model = query.shape

    def lin(x, w, b):
        return x @ w.T + b

    def project(x, w, b):
        return lin(x, w, b).reshape(B, S, h, d_k).transpose(0, 2, 1, 3)

    q = project(query, params["wq"], params["bq"])
    k = project(key, params["wk"], params["bk"])
    v = project(value, params["wv"], params["bv"])
    scores = jnp.einsum("bhqd,bhkd->bhqk", q, k)  # no sqrt(d_k) scaling
    p = jax.nn.softmax(scores, axis=-1)
    x = jnp.einsum("bhqk,bhkd->bhqd", p, v)
    x = x.transpose(0, 2, 1, 3).reshape(B, S, h * d_k)
    return lin(x, params["wo"], params["bo"]), p


# -------------------------------- main ---------------------------------------

if __name__ == "__main__":
    B, S, d_model, h = 2, 8, 32, 4
    d_k = d_model // h

    key0 = jax.random.PRNGKey(0)
    keys = jax.random.split(key0, 12)
    scale = 1.0 / jnp.sqrt(d_model).astype(jnp.float32)

    params = {
        "wq": jax.random.uniform(keys[0], (d_model, d_model), jnp.float32, -scale, scale),
        "bq": jax.random.uniform(keys[1], (d_model,), jnp.float32, -scale, scale),
        "wk": jax.random.uniform(keys[2], (d_model, d_model), jnp.float32, -scale, scale),
        "bk": jax.random.uniform(keys[3], (d_model,), jnp.float32, -scale, scale),
        "wv": jax.random.uniform(keys[4], (d_model, d_model), jnp.float32, -scale, scale),
        "bv": jax.random.uniform(keys[5], (d_model,), jnp.float32, -scale, scale),
        "wo": jax.random.uniform(keys[6], (d_model, d_model), jnp.float32, -scale, scale),
        "bo": jax.random.uniform(keys[7], (d_model,), jnp.float32, -scale, scale),
    }

    query = jax.random.normal(keys[8], (B, S, d_model), jnp.float32)
    key_in = jax.random.normal(keys[9], (B, S, d_model), jnp.float32)
    value = jax.random.normal(keys[10], (B, S, d_model), jnp.float32)

    # 1) Cross-attention, f32, with attention-map output (module's self.attn).
    out, attn = multi_headed_attention_forward(
        params, query, key_in, value, h, d_k, return_attn=True)
    out = jax.block_until_ready(out)
    attn = jax.block_until_ready(attn)

    ref_out, ref_attn = reference_forward(params, query, key_in, value, h, d_k)
    assert out.shape == (B, S, d_model)
    assert attn.shape == (B, h, S, S)
    # 1e-3 leaves headroom for the approximate EUP reciprocal in the context
    # path; the returned attention maps use an exact divide.
    assert jnp.allclose(out, ref_out, atol=1e-3, rtol=1e-3)
    assert jnp.allclose(attn, ref_attn, atol=1e-3, rtol=1e-3)

    # 2) Self-attention fast path (fused single QKV matmul, no attn writeback).
    out_self, _ = multi_headed_attention_forward(
        params, query, query, query, h, d_k, return_attn=False)
    out_self = jax.block_until_ready(out_self)
    ref_self, _ = reference_forward(params, query, query, query, h, d_k)
    assert jnp.allclose(out_self, ref_self, atol=1e-3, rtol=1e-3)

    # 3) bf16-MXU path (v6e/v7x throughput option), f32 accumulation.
    out_bf16, _ = multi_headed_attention_forward(
        params, query, key_in, value, h, d_k,
        return_attn=False, use_bf16_matmul=True)
    out_bf16 = jax.block_until_ready(out_bf16)
    assert jnp.allclose(out_bf16, ref_out, atol=5e-2, rtol=5e-2)

    print("KERNEL_OK")
</pallas_src>

<mosaic_0001>
module attributes {stable_mosaic.version = 11 : i64} {
  func.func @_mha_kernel(%arg0: i32, %arg1: memref<2x8x32xf32, #tpu.memory_space<vmem>>, %arg2: memref<2x8x32xf32, #tpu.memory_space<vmem>>, %arg3: memref<2x8x32xf32, #tpu.memory_space<vmem>>, %arg4: memref<96x32xf32, #tpu.memory_space<vmem>>, %arg5: memref<1x96xf32, #tpu.memory_space<vmem>>, %arg6: memref<32x32xf32, #tpu.memory_space<vmem>>, %arg7: memref<1x32xf32, #tpu.memory_space<vmem>>, %arg8: memref<2x8x32xf32, #tpu.memory_space<vmem>>, %arg9: memref<2x4x8x8xf32, #tpu.memory_space<vmem>>, %arg10: memref<2x8x32xf32, #tpu.memory_space<vmem>>) attributes {dimension_semantics = [#tpu.dimension_semantics<arbitrary>], iteration_bounds = array<i64: 1>, scalar_prefetch = 0 : i64, scratch_operands = 1 : i64, tpu.core_type = #tpu.core_type<tc>, window_params = [{pipeline_mode = #tpu.pipeline_mode<synchronous>, transform_indices = @transform_0, window_bounds = array<i64: 2, 8, 32>}, {pipeline_mode = #tpu.pipeline_mode<synchronous>, transform_indices = @transform_1, window_bounds = array<i64: 2, 8, 32>}, {pipeline_mode = #tpu.pipeline_mode<synchronous>, transform_indices = @transform_2, window_bounds = array<i64: 2, 8, 32>}, {pipeline_mode = #tpu.pipeline_mode<synchronous>, transform_indices = @transform_3, window_bounds = array<i64: 96, 32>}, {pipeline_mode = #tpu.pipeline_mode<synchronous>, transform_indices = @transform_4, window_bounds = array<i64: 1, 96>}, {pipeline_mode = #tpu.pipeline_mode<synchronous>, transform_indices = @transform_5, window_bounds = array<i64: 32, 32>}, {pipeline_mode = #tpu.pipeline_mode<synchronous>, transform_indices = @transform_6, window_bounds = array<i64: 1, 32>}, {pipeline_mode = #tpu.pipeline_mode<synchronous>, transform_indices = @transform_7, window_bounds = array<i64: 2, 8, 32>}, {pipeline_mode = #tpu.pipeline_mode<synchronous>, transform_indices = @transform_8, window_bounds = array<i64: 2, 4, 8, 8>}]} {
    %c0 = arith.constant 0 : index
    %c0_0 = arith.constant 0 : index
    %0 = vector.load %arg4[%c0, %c0_0] : memref<96x32xf32, #tpu.memory_space<vmem>>, vector<96x32xf32>
    %c0_1 = arith.constant 0 : index
    %c0_2 = arith.constant 0 : index
    %1 = vector.load %arg5[%c0_1, %c0_2] : memref<1x96xf32, #tpu.memory_space<vmem>>, vector<1x96xf32>
    %c0_3 = arith.constant 0 : index
    %c0_4 = arith.constant 0 : index
    %c0_5 = arith.constant 0 : index
    %2 = vector.load %arg1[%c0_3, %c0_4, %c0_5] : memref<2x8x32xf32, #tpu.memory_space<vmem>>, vector<2x8x32xf32>
    %3 = vector.shape_cast %2 : vector<2x8x32xf32> to vector<16x32xf32>
    %4 = vector.extract_strided_slice %0 {offsets = [0, 0], sizes = [32, 32], strides = [1, 1]} : vector<96x32xf32> to vector<32x32xf32>
    %5 = vector.extract_strided_slice %1 {offsets = [0, 0], sizes = [1, 32], strides = [1, 1]} : vector<1x96xf32> to vector<1x32xf32>
    %cst = arith.constant dense<0.000000e+00> : vector<16x32xf32>
    %6 = tpu.matmul %3, %4, %cst {dimension_numbers = #tpu.dot_dimension_numbers<[1], [1], [0], [0], [0, 0, 1, 0], [], []>} : vector<16x32xf32>, vector<32x32xf32>, vector<16x32xf32> -> vector<16x32xf32>
    %7 = vector.broadcast %5 : vector<1x32xf32> to vector<16x32xf32>
    %8 = arith.addf %6, %7 : vector<16x32xf32>
    %c0_6 = arith.constant 0 : index
    %c0_7 = arith.constant 0 : index
    %c0_8 = arith.constant 0 : index
    %9 = vector.load %arg2[%c0_6, %c0_7, %c0_8] : memref<2x8x32xf32, #tpu.memory_space<vmem>>, vector<2x8x32xf32>
    %10 = vector.shape_cast %9 : vector<2x8x32xf32> to vector<16x32xf32>
    %11 = vector.extract_strided_slice %0 {offsets = [32, 0], sizes = [32, 32], strides = [1, 1]} : vector<96x32xf32> to vector<32x32xf32>
    %12 = vector.extract_strided_slice %1 {offsets = [0, 32], sizes = [1, 32], strides = [1, 1]} : vector<1x96xf32> to vector<1x32xf32>
    %cst_9 = arith.constant dense<0.000000e+00> : vector<16x32xf32>
    %13 = tpu.matmul %10, %11, %cst_9 {dimension_numbers = #tpu.dot_dimension_numbers<[1], [1], [0], [0], [0, 0, 1, 0], [], []>} : vector<16x32xf32>, vector<32x32xf32>, vector<16x32xf32> -> vector<16x32xf32>
    %14 = vector.broadcast %12 : vector<1x32xf32> to vector<16x32xf32>
    %15 = arith.addf %13, %14 : vector<16x32xf32>
    %c0_10 = arith.constant 0 : index
    %c0_11 = arith.constant 0 : index
    %c0_12 = arith.constant 0 : index
    %16 = vector.load %arg3[%c0_10, %c0_11, %c0_12] : memref<2x8x32xf32, #tpu.memory_space<vmem>>, vector<2x8x32xf32>
    %17 = vector.shape_cast %16 : vector<2x8x32xf32> to vector<16x32xf32>
    %18 = vector.extract_strided_slice %0 {offsets = [64, 0], sizes = [32, 32], strides = [1, 1]} : vector<96x32xf32> to vector<32x32xf32>
    %19 = vector.extract_strided_slice %1 {offsets = [0, 64], sizes = [1, 32], strides = [1, 1]} : vector<1x96xf32> to vector<1x32xf32>
    %cst_13 = arith.constant dense<0.000000e+00> : vector<16x32xf32>
    %20 = tpu.matmul %17, %18, %cst_13 {dimension_numbers = #tpu.dot_dimension_numbers<[1], [1], [0], [0], [0, 0, 1, 0], [], []>} : vector<16x32xf32>, vector<32x32xf32>, vector<16x32xf32> -> vector<16x32xf32>
    %21 = vector.broadcast %19 : vector<1x32xf32> to vector<16x32xf32>
    %22 = arith.addf %20, %21 : vector<16x32xf32>
    %23 = vector.shape_cast %8 : vector<16x32xf32> to vector<2x8x32xf32>
    %24 = vector.shape_cast %15 : vector<16x32xf32> to vector<2x8x32xf32>
    %25 = vector.shape_cast %22 : vector<16x32xf32> to vector<2x8x32xf32>
    %26 = vector.extract_strided_slice %23 {offsets = [0, 0, 0], sizes = [2, 8, 8], strides = [1, 1, 1]} : vector<2x8x32xf32> to vector<2x8x8xf32>
    %27 = vector.extract_strided_slice %24 {offsets = [0, 0, 0], sizes = [2, 8, 8], strides = [1, 1, 1]} : vector<2x8x32xf32> to vector<2x8x8xf32>
    %28 = vector.extract_strided_slice %25 {offsets = [0, 0, 0], sizes = [2, 8, 8], strides = [1, 1, 1]} : vector<2x8x32xf32> to vector<2x8x8xf32>
    "tpu.trace_start"() <{level = 10 : i32, message = "bqd,bkd->bqk"}> : () -> ()
    %cst_14 = arith.constant dense<0.000000e+00> : vector<2x8x8xf32>
    %29 = tpu.matmul %26, %27, %cst_14 {dimension_numbers = #tpu.dot_dimension_numbers<[2], [2], [1], [1], [0, 0, 0, 1, 1, 1], [0], [0]>} : vector<2x8x8xf32>, vector<2x8x8xf32>, vector<2x8x8xf32> -> vector<2x8x8xf32>
    "tpu.trace_stop"() : () -> ()
    %cst_15 = arith.constant dense<0xFF800000> : vector<2x8xf32>
    %30 = vector.multi_reduction <maximumf>, %29, %cst_15 [2] : vector<2x8x8xf32> to vector<2x8xf32>
    %31 = vector.shape_cast %30 : vector<2x8xf32> to vector<2x8x1xf32>
    %32 = vector.broadcast %31 : vector<2x8x1xf32> to vector<2x8x8xf32>
    %33 = arith.subf %29, %32 : vector<2x8x8xf32>
    %34 = math.exp %33 : vector<2x8x8xf32>
    %cst_16 = arith.constant dense<0.000000e+00> : vector<2x8xf32>
    %35 = vector.multi_reduction <add>, %34, %cst_16 [2] : vector<2x8x8xf32> to vector<2x8xf32>
    %36 = vector.shape_cast %35 : vector<2x8xf32> to vector<2x8x1xf32>
    %37 = tpu.reciprocal %36 {approx = true} : vector<2x8x1xf32> -> vector<2x8x1xf32>
    %38 = vector.broadcast %37 : vector<2x8x1xf32> to vector<2x8x8xf32>
    %39 = arith.mulf %34, %38 : vector<2x8x8xf32>
    %40 = vector.broadcast %36 : vector<2x8x1xf32> to vector<2x8x8xf32>
    %41 = arith.divf %34, %40 : vector<2x8x8xf32>
    %c0_17 = arith.constant 0 : index
    %c0_18 = arith.constant 0 : index
    %c0_19 = arith.constant 0 : index
    %c0_20 = arith.constant 0 : index
    %42 = vector.load %arg9[%c0_17, %c0_18, %c0_19, %c0_20] : memref<2x4x8x8xf32, #tpu.memory_space<vmem>>, vector<2x1x8x8xf32>
    %43 = vector.shape_cast %42 : vector<2x1x8x8xf32> to vector<2x8x8xf32>
    %44 = vector.shape_cast %41 : vector<2x8x8xf32> to vector<2x1x8x8xf32>
    tpu.vector_store %arg9[%c0_17, %c0_18, %c0_19, %c0_20], %44 {strides = array<i32>} : memref<2x4x8x8xf32, #tpu.memory_space<vmem>>, vector<2x1x8x8xf32>,
    "tpu.trace_start"() <{level = 10 : i32, message = "bqk,bkd->bqd"}> : () -> ()
    %cst_21 = arith.constant dense<0.000000e+00> : vector<2x8x8xf32>
    %45 = tpu.matmul %39, %28, %cst_21 {dimension_numbers = #tpu.dot_dimension_numbers<[2], [1], [1], [2], [0, 0, 0, 1, 1, 2], [0], [0]>} : vector<2x8x8xf32>, vector<2x8x8xf32>, vector<2x8x8xf32> -> vector<2x8x8xf32>
    "tpu.trace_stop"() : () -> ()
    %c0_22 = arith.constant 0 : index
    %c0_23 = arith.constant 0 : index
    %c0_24 = arith.constant 0 : index
    %46 = vector.load %arg10[%c0_22, %c0_23, %c0_24] : memref<2x8x32xf32, #tpu.memory_space<vmem>>, vector<2x8x8xf32>
    tpu.vector_store %arg10[%c0_22, %c0_23, %c0_24], %45 {strides = array<i32>} : memref<2x8x32xf32, #tpu.memory_space<vmem>>, vector<2x8x8xf32>,
    %47 = vector.extract_strided_slice %23 {offsets = [0, 0, 8], sizes = [2, 8, 8], strides = [1, 1, 1]} : vector<2x8x32xf32> to vector<2x8x8xf32>
    %48 = vector.extract_strided_slice %24 {offsets = [0, 0, 8], sizes = [2, 8, 8], strides = [1, 1, 1]} : vector<2x8x32xf32> to vector<2x8x8xf32>
    %49 = vector.extract_strided_slice %25 {offsets = [0, 0, 8], sizes = [2, 8, 8], strides = [1, 1, 1]} : vector<2x8x32xf32> to vector<2x8x8xf32>
    "tpu.trace_start"() <{level = 10 : i32, message = "bqd,bkd->bqk"}> : () -> ()
    %cst_25 = arith.constant dense<0.000000e+00> : vector<2x8x8xf32>
    %50 = tpu.matmul %47, %48, %cst_25 {dimension_numbers = #tpu.dot_dimension_numbers<[2], [2], [1], [1], [0, 0, 0, 1, 1, 1], [0], [0]>} : vector<2x8x8xf32>, vector<2x8x8xf32>, vector<2x8x8xf32> -> vector<2x8x8xf32>
    "tpu.trace_stop"() : () -> ()
    %cst_26 = arith.constant dense<0xFF800000> : vector<2x8xf32>
    %51 = vector.multi_reduction <maximumf>, %50, %cst_26 [2] : vector<2x8x8xf32> to vector<2x8xf32>
    %52 = vector.shape_cast %51 : vector<2x8xf32> to vector<2x8x1xf32>
    %53 = vector.broadcast %52 : vector<2x8x1xf32> to vector<2x8x8xf32>
    %54 = arith.subf %50, %53 : vector<2x8x8xf32>
    %55 = math.exp %54 : vector<2x8x8xf32>
    %cst_27 = arith.constant dense<0.000000e+00> : vector<2x8xf32>
    %56 = vector.multi_reduction <add>, %55, %cst_27 [2] : vector<2x8x8xf32> to vector<2x8xf32>
    %57 = vector.shape_cast %56 : vector<2x8xf32> to vector<2x8x1xf32>
    %58 = tpu.reciprocal %57 {approx = true} : vector<2x8x1xf32> -> vector<2x8x1xf32>
    %59 = vector.broadcast %58 : vector<2x8x1xf32> to vector<2x8x8xf32>
    %60 = arith.mulf %55, %59 : vector<2x8x8xf32>
    %61 = vector.broadcast %57 : vector<2x8x1xf32> to vector<2x8x8xf32>
    %62 = arith.divf %55, %61 : vector<2x8x8xf32>
    %c0_28 = arith.constant 0 : index
    %c1 = arith.constant 1 : index
    %c0_29 = arith.constant 0 : index
    %c0_30 = arith.constant 0 : index
    %63 = vector.load %arg9[%c0_28, %c1, %c0_29, %c0_30] : memref<2x4x8x8xf32, #tpu.memory_space<vmem>>, vector<2x1x8x8xf32>
    %64 = vector.shape_cast %63 : vector<2x1x8x8xf32> to vector<2x8x8xf32>
    %65 = vector.shape_cast %62 : vector<2x8x8xf32> to vector<2x1x8x8xf32>
    tpu.vector_store %arg9[%c0_28, %c1, %c0_29, %c0_30], %65 {strides = array<i32>} : memref<2x4x8x8xf32, #tpu.memory_space<vmem>>, vector<2x1x8x8xf32>,
    "tpu.trace_start"() <{level = 10 : i32, message = "bqk,bkd->bqd"}> : () -> ()
    %cst_31 = arith.constant dense<0.000000e+00> : vector<2x8x8xf32>
    %66 = tpu.matmul %60, %49, %cst_31 {dimension_numbers = #tpu.dot_dimension_numbers<[2], [1], [1], [2], [0, 0, 0, 1, 1, 2], [0], [0]>} : vector<2x8x8xf32>, vector<2x8x8xf32>, vector<2x8x8xf32> -> vector<2x8x8xf32>
    "tpu.trace_stop"() : () -> ()
    %c0_32 = arith.constant 0 : index
    %c0_33 = arith.constant 0 : index
    %c8 = arith.constant 8 : index
    %67 = vector.load %arg10[%c0_32, %c0_33, %c8] : memref<2x8x32xf32, #tpu.memory_space<vmem>>, vector<2x8x8xf32>
    tpu.vector_store %arg10[%c0_32, %c0_33, %c8], %66 {strides = array<i32>} : memref<2x8x32xf32, #tpu.memory_space<vmem>>, vector<2x8x8xf32>,
    %68 = vector.extract_strided_slice %23 {offsets = [0, 0, 16], sizes = [2, 8, 8], strides = [1, 1, 1]} : vector<2x8x32xf32> to vector<2x8x8xf32>
    %69 = vector.extract_strided_slice %24 {offsets = [0, 0, 16], sizes = [2, 8, 8], strides = [1, 1, 1]} : vector<2x8x32xf32> to vector<2x8x8xf32>
    %70 = vector.extract_strided_slice %25 {offsets = [0, 0, 16], sizes = [2, 8, 8], strides = [1, 1, 1]} : vector<2x8x32xf32> to vector<2x8x8xf32>
    "tpu.trace_start"() <{level = 10 : i32, message = "bqd,bkd->bqk"}> : () -> ()
    %cst_34 = arith.constant dense<0.000000e+00> : vector<2x8x8xf32>
    %71 = tpu.matmul %68, %69, %cst_34 {dimension_numbers = #tpu.dot_dimension_numbers<[2], [2], [1], [1], [0, 0, 0, 1, 1, 1], [0], [0]>} : vector<2x8x8xf32>, vector<2x8x8xf32>, vector<2x8x8xf32> -> vector<2x8x8xf32>
    "tpu.trace_stop"() : () -> ()
    %cst_35 = arith.constant dense<0xFF800000> : vector<2x8xf32>
    %72 = vector.multi_reduction <maximumf>, %71, %cst_35 [2] : vector<2x8x8xf32> to vector<2x8xf32>
    %73 = vector.shape_cast %72 : vector<2x8xf32> to vector<2x8x1xf32>
    %74 = vector.broadcast %73 : vector<2x8x1xf32> to vector<2x8x8xf32>
    %75 = arith.subf %71, %74 : vector<2x8x8xf32>
    %76 = math.exp %75 : vector<2x8x8xf32>
    %cst_36 = arith.constant dense<0.000000e+00> : vector<2x8xf32>
    %77 = vector.multi_reduction <add>, %76, %cst_36 [2] : vector<2x8x8xf32> to vector<2x8xf32>
    %78 = vector.shape_cast %77 : vector<2x8xf32> to vector<2x8x1xf32>
    %79 = tpu.reciprocal %78 {approx = true} : vector<2x8x1xf32> -> vector<2x8x1xf32>
    %80 = vector.broadcast %79 : vector<2x8x1xf32> to vector<2x8x8xf32>
    %81 = arith.mulf %76, %80 : vector<2x8x8xf32>
    %82 = vector.broadcast %78 : vector<2x8x1xf32> to vector<2x8x8xf32>
    %83 = arith.divf %76, %82 : vector<2x8x8xf32>
    %c0_37 = arith.constant 0 : index
    %c2 = arith.constant 2 : index
    %c0_38 = arith.constant 0 : index
    %c0_39 = arith.constant 0 : index
    %84 = vector.load %arg9[%c0_37, %c2, %c0_38, %c0_39] : memref<2x4x8x8xf32, #tpu.memory_space<vmem>>, vector<2x1x8x8xf32>
    %85 = vector.shape_cast %84 : vector<2x1x8x8xf32> to vector<2x8x8xf32>
    %86 = vector.shape_cast %83 : vector<2x8x8xf32> to vector<2x1x8x8xf32>
    tpu.vector_store %arg9[%c0_37, %c2, %c0_38, %c0_39], %86 {strides = array<i32>} : memref<2x4x8x8xf32, #tpu.memory_space<vmem>>, vector<2x1x8x8xf32>,
    "tpu.trace_start"() <{level = 10 : i32, message = "bqk,bkd->bqd"}> : () -> ()
    %cst_40 = arith.constant dense<0.000000e+00> : vector<2x8x8xf32>
    %87 = tpu.matmul %81, %70, %cst_40 {dimension_numbers = #tpu.dot_dimension_numbers<[2], [1], [1], [2], [0, 0, 0, 1, 1, 2], [0], [0]>} : vector<2x8x8xf32>, vector<2x8x8xf32>, vector<2x8x8xf32> -> vector<2x8x8xf32>
    "tpu.trace_stop"() : () -> ()
    %c0_41 = arith.constant 0 : index
    %c0_42 = arith.constant 0 : index
    %c16 = arith.constant 16 : index
    %88 = vector.load %arg10[%c0_41, %c0_42, %c16] : memref<2x8x32xf32, #tpu.memory_space<vmem>>, vector<2x8x8xf32>
    tpu.vector_store %arg10[%c0_41, %c0_42, %c16], %87 {strides = array<i32>} : memref<2x8x32xf32, #tpu.memory_space<vmem>>, vector<2x8x8xf32>,
    %89 = vector.extract_strided_slice %23 {offsets = [0, 0, 24], sizes = [2, 8, 8], strides = [1, 1, 1]} : vector<2x8x32xf32> to vector<2x8x8xf32>
    %90 = vector.extract_strided_slice %24 {offsets = [0, 0, 24], sizes = [2, 8, 8], strides = [1, 1, 1]} : vector<2x8x32xf32> to vector<2x8x8xf32>
    %91 = vector.extract_strided_slice %25 {offsets = [0, 0, 24], sizes = [2, 8, 8], strides = [1, 1, 1]} : vector<2x8x32xf32> to vector<2x8x8xf32>
    "tpu.trace_start"() <{level = 10 : i32, message = "bqd,bkd->bqk"}> : () -> ()
    %cst_43 = arith.constant dense<0.000000e+00> : vector<2x8x8xf32>
    %92 = tpu.matmul %89, %90, %cst_43 {dimension_numbers = #tpu.dot_dimension_numbers<[2], [2], [1], [1], [0, 0, 0, 1, 1, 1], [0], [0]>} : vector<2x8x8xf32>, vector<2x8x8xf32>, vector<2x8x8xf32> -> vector<2x8x8xf32>
    "tpu.trace_stop"() : () -> ()
    %cst_44 = arith.constant dense<0xFF800000> : vector<2x8xf32>
    %93 = vector.multi_reduction <maximumf>, %92, %cst_44 [2] : vector<2x8x8xf32> to vector<2x8xf32>
    %94 = vector.shape_cast %93 : vector<2x8xf32> to vector<2x8x1xf32>
    %95 = vector.broadcast %94 : vector<2x8x1xf32> to vector<2x8x8xf32>
    %96 = arith.subf %92, %95 : vector<2x8x8xf32>
    %97 = math.exp %96 : vector<2x8x8xf32>
    %cst_45 = arith.constant dense<0.000000e+00> : vector<2x8xf32>
    %98 = vector.multi_reduction <add>, %97, %cst_45 [2] : vector<2x8x8xf32> to vector<2x8xf32>
    %99 = vector.shape_cast %98 : vector<2x8xf32> to vector<2x8x1xf32>
    %100 = tpu.reciprocal %99 {approx = true} : vector<2x8x1xf32> -> vector<2x8x1xf32>
    %101 = vector.broadcast %100 : vector<2x8x1xf32> to vector<2x8x8xf32>
    %102 = arith.mulf %97, %101 : vector<2x8x8xf32>
    %103 = vector.broadcast %99 : vector<2x8x1xf32> to vector<2x8x8xf32>
    %104 = arith.divf %97, %103 : vector<2x8x8xf32>
    %c0_46 = arith.constant 0 : index
    %c3 = arith.constant 3 : index
    %c0_47 = arith.constant 0 : index
    %c0_48 = arith.constant 0 : index
    %105 = vector.load %arg9[%c0_46, %c3, %c0_47, %c0_48] : memref<2x4x8x8xf32, #tpu.memory_space<vmem>>, vector<2x1x8x8xf32>
    %106 = vector.shape_cast %105 : vector<2x1x8x8xf32> to vector<2x8x8xf32>
    %107 = vector.shape_cast %104 : vector<2x8x8xf32> to vector<2x1x8x8xf32>
    tpu.vector_store %arg9[%c0_46, %c3, %c0_47, %c0_48], %107 {strides = array<i32>} : memref<2x4x8x8xf32, #tpu.memory_space<vmem>>, vector<2x1x8x8xf32>,
    "tpu.trace_start"() <{level = 10 : i32, message = "bqk,bkd->bqd"}> : () -> ()
    %cst_49 = arith.constant dense<0.000000e+00> : vector<2x8x8xf32>
    %108 = tpu.matmul %102, %91, %cst_49 {dimension_numbers = #tpu.dot_dimension_numbers<[2], [1], [1], [2], [0, 0, 0, 1, 1, 2], [0], [0]>} : vector<2x8x8xf32>, vector<2x8x8xf32>, vector<2x8x8xf32> -> vector<2x8x8xf32>
    "tpu.trace_stop"() : () -> ()
    %c0_50 = arith.constant 0 : index
    %c0_51 = arith.constant 0 : index
    %c24 = arith.constant 24 : index
    %109 = vector.load %arg10[%c0_50, %c0_51, %c24] : memref<2x8x32xf32, #tpu.memory_space<vmem>>, vector<2x8x8xf32>
    tpu.vector_store %arg10[%c0_50, %c0_51, %c24], %108 {strides = array<i32>} : memref<2x8x32xf32, #tpu.memory_space<vmem>>, vector<2x8x8xf32>,
    %c0_52 = arith.constant 0 : index
    %c0_53 = arith.constant 0 : index
    %c0_54 = arith.constant 0 : index
    %110 = vector.load %arg10[%c0_52, %c0_53, %c0_54] : memref<2x8x32xf32, #tpu.memory_space<vmem>>, vector<2x8x32xf32>
    %111 = vector.shape_cast %110 : vector<2x8x32xf32> to vector<16x32xf32>
    %c0_55 = arith.constant 0 : index
    %c0_56 = arith.constant 0 : index
    %112 = vector.load %arg6[%c0_55, %c0_56] : memref<32x32xf32, #tpu.memory_space<vmem>>, vector<32x32xf32>
    %c0_57 = arith.constant 0 : index
    %c0_58 = arith.constant 0 : index
    %113 = vector.load %arg7[%c0_57, %c0_58] : memref<1x32xf32, #tpu.memory_space<vmem>>, vector<1x32xf32>
    %cst_59 = arith.constant dense<0.000000e+00> : vector<16x32xf32>
    %114 = tpu.matmul %111, %112, %cst_59 {dimension_numbers = #tpu.dot_dimension_numbers<[1], [1], [0], [0], [0, 0, 1, 0], [], []>} : vector<16x32xf32>, vector<32x32xf32>, vector<16x32xf32> -> vector<16x32xf32>
    %115 = vector.broadcast %113 : vector<1x32xf32> to vector<16x32xf32>
    %116 = arith.addf %114, %115 : vector<16x32xf32>
    %117 = vector.shape_cast %116 : vector<16x32xf32> to vector<2x8x32xf32>
    %c0_60 = arith.constant 0 : index
    %c0_61 = arith.constant 0 : index
    %c0_62 = arith.constant 0 : index
    %118 = vector.load %arg8[%c0_60, %c0_61, %c0_62] : memref<2x8x32xf32, #tpu.memory_space<vmem>>, vector<2x8x32xf32>
    tpu.vector_store %arg8[%c0_60, %c0_61, %c0_62], %117 {strides = array<i32>} : memref<2x8x32xf32, #tpu.memory_space<vmem>>, vector<2x8x32xf32>,
    return
  }
  func.func @transform_0(%arg0: i32) -> (i32, i32, i32) {
    %c0_i32 = arith.constant 0 : i32
    %c0_i32_0 = arith.constant 0 : i32
    %c0_i32_1 = arith.constant 0 : i32
    %c0_i32_2 = arith.constant 0 : i32
    return %c0_i32, %c0_i32_0, %c0_i32_1 : i32, i32, i32
  }
  func.func @transform_1(%arg0: i32) -> (i32, i32, i32) {
    %c0_i32 = arith.constant 0 : i32
    %c0_i32_0 = arith.constant 0 : i32
    %c0_i32_1 = arith.constant 0 : i32
    %c0_i32_2 = arith.constant 0 : i32
    return %c0_i32, %c0_i32_0, %c0_i32_1 : i32, i32, i32
  }
  func.func @transform_2(%arg0: i32) -> (i32, i32, i32) {
    %c0_i32 = arith.constant 0 : i32
    %c0_i32_0 = arith.constant 0 : i32
    %c0_i32_1 = arith.constant 0 : i32
    %c0_i32_2 = arith.constant 0 : i32
    return %c0_i32, %c0_i32_0, %c0_i32_1 : i32, i32, i32
  }
  func.func @transform_3(%arg0: i32) -> (i32, i32) {
    %c0_i32 = arith.constant 0 : i32
    %c0_i32_0 = arith.constant 0 : i32
    %c0_i32_1 = arith.constant 0 : i32
    return %c0_i32, %c0_i32_0 : i32, i32
  }
  func.func @transform_4(%arg0: i32) -> (i32, i32) {
    %c0_i32 = arith.constant 0 : i32
    %c0_i32_0 = arith.constant 0 : i32
    %c0_i32_1 = arith.constant 0 : i32
    return %c0_i32, %c0_i32_0 : i32, i32
  }
  func.func @transform_5(%arg0: i32) -> (i32, i32) {
    %c0_i32 = arith.constant 0 : i32
    %c0_i32_0 = arith.constant 0 : i32
    %c0_i32_1 = arith.constant 0 : i32
    return %c0_i32, %c0_i32_0 : i32, i32
  }
  func.func @transform_6(%arg0: i32) -> (i32, i32) {
    %c0_i32 = arith.constant 0 : i32
    %c0_i32_0 = arith.constant 0 : i32
    %c0_i32_1 = arith.constant 0 : i32
    return %c0_i32, %c0_i32_0 : i32, i32
  }
  func.func @transform_7(%arg0: i32) -> (i32, i32, i32) {
    %c0_i32 = arith.constant 0 : i32
    %c0_i32_0 = arith.constant 0 : i32
    %c0_i32_1 = arith.constant 0 : i32
    %c0_i32_2 = arith.constant 0 : i32
    return %c0_i32, %c0_i32_0, %c0_i32_1 : i32, i32, i32
  }
  func.func @transform_8(%arg0: i32) -> (i32, i32, i32, i32) {
    %c0_i32 = arith.constant 0 : i32
    %c0_i32_0 = arith.constant 0 : i32
    %c0_i32_1 = arith.constant 0 : i32
    %c0_i32_2 = arith.constant 0 : i32
    %c0_i32_3 = arith.constant 0 : i32
    return %c0_i32, %c0_i32_0, %c0_i32_1, %c0_i32_2 : i32, i32, i32, i32
  }
}

</mosaic_0001>

<llo_original>
// kernel: tpu_custom_call.1
$region0: #{tpu_custom_call.1}
  #allocation0 [shape = 'u32[]', space=smem, size = 0x4, offset = 0x4, fixed_abs, tag = 'smem constant byte address 0x4 - core index']
  #allocation1 [shape = 'u32[72,128]{1,0:T(1,128)}', space=vmem, size = 0x9000, scoped, tag = 'internal scratch']
  #allocation2 [shape = 'f32[2,8,32]{2,1,0:T(8,128)}', space=vmem, size = 0x2000, scoped, tag = 'scratch operand']
  %s0 = inlined_call_operand.vmem [shape: f32[2,8,32], index: 0, kind: input, shape index: {}]
  %s1 = inlined_call_operand.vmem [shape: f32[2,8,32], index: 1, kind: input, shape index: {}]
  %s2 = inlined_call_operand.vmem [shape: f32[2,8,32], index: 2, kind: input, shape index: {}]
  %s3 = inlined_call_operand.vmem [shape: f32[96,32], index: 3, kind: input, shape index: {}]
  %s4 = inlined_call_operand.vmem [shape: f32[1,96], index: 4, kind: input, shape index: {}]
  %s5 = inlined_call_operand.vmem [shape: f32[32,32], index: 5, kind: input, shape index: {}]
  %s6 = inlined_call_operand.vmem [shape: f32[1,32], index: 6, kind: input, shape index: {}]
  %s7 = inlined_call_operand.hbm [shape: f32[2,8,32], index: 7, kind: output, shape index: {0}]
  %s8 = inlined_call_operand.hbm [shape: f32[2,4,8,8], index: 8, kind: output, shape index: {1}]
  %9 = xla_tuple %s7, %s8
  %s10 = sld [smem:[#allocation0]]
  $region46: #{tpu_custom_call.1} parent=0
    _
  %s12 = ssub.s32 1, %s10
  %s13 = scalar_select 0, %s12, %s10
  $region1: #{tpu_custom_call.1} parent=0
    #allocation3 [shape = 'u8[8192]{0}', space=vmem, size = 0x2000, scoped, tag = 'output window, operand 0, single buffered']
    #allocation4 [shape = 's32[1]{0}', space=sflag, size = 0x4, scoped, tag = 'scoped memory for tpu_custom_call.1']
    #allocation5 [shape = 'u8[32768]{0}', space=vmem, size = 0x8000, scoped, tag = 'output window, operand 1, single buffered']
    #allocation6 [shape = 's32[1]{0}', space=sflag, size = 0x4, scoped, tag = 'scoped memory for tpu_custom_call.1']
    %14 = vsyncpa [#allocation4], 0
    %15 = vsyncpa [#allocation6], 0
    // Predicated region
    $region2: #{tpu_custom_call.1} parent=1 // pred_check
      _
    $region3: #{tpu_custom_call.1} parent=1 // pred_check_branch
      %17 = sbr.rel (0) target = $region5
    $region4: #{tpu_custom_call.1} parent=1 // pred_region
      _
    $region5: #{tpu_custom_call.1} parent=1 // pred_fallthru
      _
    // Predicated region
    $region6: #{tpu_custom_call.1} parent=1 // pred_check
      _
    $region7: #{tpu_custom_call.1} parent=1 // pred_check_branch
      %19 = sbr.rel (0) target = $region9
    $region8: #{tpu_custom_call.1} parent=1 // pred_region
      _
    $region9: #{tpu_custom_call.1} parent=1 // pred_fallthru
      _
    // Predicated region
    $region10: #{tpu_custom_call.1} parent=1 // pred_check
      _
    $region11: #{tpu_custom_call.1} parent=1 // pred_check_branch
      %21 = sbr.rel (0) target = $region13
    $region12: #{tpu_custom_call.1} parent=1 // pred_region
      _
    $region13: #{tpu_custom_call.1} parent=1 // pred_fallthru
      _
    // Predicated region
    $region14: #{tpu_custom_call.1} parent=1 // pred_check
      _
    $region15: #{tpu_custom_call.1} parent=1 // pred_check_branch
      %23 = sbr.rel (0) target = $region17
    $region16: #{tpu_custom_call.1} parent=1 // pred_region
      _
    $region17: #{tpu_custom_call.1} parent=1 // pred_fallthru
      _
    // Predicated region
    $region18: #{tpu_custom_call.1} parent=1 // pred_check
      _
    $region19: #{tpu_custom_call.1} parent=1 // pred_check_branch
      %25 = sbr.rel (0) target = $region21
    $region20: #{tpu_custom_call.1} parent=1 // pred_region
      _
    $region21: #{tpu_custom_call.1} parent=1 // pred_fallthru
      _
    // Predicated region
    $region22: #{tpu_custom_call.1} parent=1 // pred_check
      _
    $region23: #{tpu_custom_call.1} parent=1 // pred_check_branch
      %27 = sbr.rel (0) target = $region25
    $region24: #{tpu_custom_call.1} parent=1 // pred_region
      _
    $region25: #{tpu_custom_call.1} parent=1 // pred_fallthru
      _
    // Predicated region
    $region26: #{tpu_custom_call.1} parent=1 // pred_check
      _
    $region27: #{tpu_custom_call.1} parent=1 // pred_check_branch
      %29 = sbr.rel (0) target = $region29
    $region28: #{tpu_custom_call.1} parent=1 // pred_region
      _
    $region29: #{tpu_custom_call.1} parent=1 // pred_fallthru
      _
    %v30 = vld [vmem:[%s3] sm:$0xff]
    %v31 = vld [vmem:[%s3 + $0x8] sm:$0xff]
    %v32 = vld [vmem:[%s3 + $0x10] sm:$0xff]
    %v33 = vld [vmem:[%s3 + $0x18] sm:$0xff]
    %v34 = vld [vmem:[%s3 + $0x20] sm:$0xff]
    %v35 = vld [vmem:[%s3 + $0x28] sm:$0xff]
    %v36 = vld [vmem:[%s3 + $0x30] sm:$0xff]
    %v37 = vld [vmem:[%s3 + $0x38] sm:$0xff]
    %v38 = vld [vmem:[%s3 + $0x40] sm:$0xff]
    %v39 = vld [vmem:[%s3 + $0x48] sm:$0xff]
    %v40 = vld [vmem:[%s3 + $0x50] sm:$0xff]
    %v41 = vld [vmem:[%s3 + $0x58] sm:$0xff]
    %v42 = vld [vmem:[%s4] sm:$0x1]
    %v43 = vld [vmem:[%s0] sm:$0xff]
    %v44 = vld [vmem:[%s0 + $0x8] sm:$0xff]
    %v46 = vperm.slane %v42, 0
    %vm48 = vcmask 261120
    %v50 = vsel %vm48, %v43, 0
    %v53 = vsel %vm48, %v44, 0
    %v56 = vsel %vm48, %v30, 0
    %v59 = vsel %vm48, %v31, 0
    %v62 = vsel %vm48, %v32, 0
    %v65 = vsel %vm48, %v33, 0
    %67 = vmatpush.xpose.msra.mxu0 0.0
    %68 = vmatpush.xpose.msra.mxu0 0.0
    %69 = vmatpush.xpose.msra.mxu0 0.0
    %70 = vmatpush.xpose.msra.mxu0 0.0
    %71 = vmatpush.xpose.msra.mxu0 0.0
    %72 = vmatpush.xpose.msra.mxu0 0.0
    %73 = vmatpush.xpose.msra.mxu0 0.0
    %74 = vmatpush.xpose.msra.mxu0 0.0
    %75 = vmatpush.xpose.msra.mxu0 0.0
    %76 = vmatpush.xpose.msra.mxu0 0.0
    %77 = vmatpush.xpose.msra.mxu0 0.0
    %78 = vmatpush.xpose.msra.mxu0 0.0
    %79 = vmatpush.xpose.msra.mxu0 %v65
    %80 = vmatpush.xpose.msra.mxu0 %v62
    %81 = vmatpush.xpose.msra.mxu0 %v59
    %82 = vmatpush.xpose.msra.mxu0 %v56
    %83 = vmatmul.f32.gmra.mxu0 %v50
    %v84 = vpop.f32.mrf.mxu0
    %v85 = vadd.f32 %v46, %v84
    %86 = vmatmul.f32.gmra.mxu0 %v53
    %v87 = vpop.f32.mrf.mxu0
    %v88 = vadd.f32 %v46, %v87
    %89 = vdwg.mxu0
    %v90 = vld [vmem:[%s1] sm:$0xff]
    %v91 = vld [vmem:[%s1 + $0x8] sm:$0xff]
    %92 = vrot.lane.b32.xlu0 %v46, 96
    %v93 = vpop.permute.xlu0 %92
    %v96 = vsel %vm48, %v90, 0
    %v99 = vsel %vm48, %v91, 0
    %v102 = vsel %vm48, %v34, 0
    %v105 = vsel %vm48, %v35, 0
    %v108 = vsel %vm48, %v36, 0
    %v111 = vsel %vm48, %v37, 0
    %113 = vmatpush.xpose.msra.mxu0 0.0
    %114 = vmatpush.xpose.msra.mxu0 0.0
    %115 = vmatpush.xpose.msra.mxu0 0.0
    %116 = vmatpush.xpose.msra.mxu0 0.0
    %117 = vmatpush.xpose.msra.mxu0 0.0
    %118 = vmatpush.xpose.msra.mxu0 0.0
    %119 = vmatpush.xpose.msra.mxu0 0.0
    %120 = vmatpush.xpose.msra.mxu0 0.0
    %121 = vmatpush.xpose.msra.mxu0 0.0
    %122 = vmatpush.xpose.msra.mxu0 0.0
    %123 = vmatpush.xpose.msra.mxu0 0.0
    %124 = vmatpush.xpose.msra.mxu0 0.0
    %125 = vmatpush.xpose.msra.mxu0 %v111
    %126 = vmatpush.xpose.msra.mxu0 %v108
    %127 = vmatpush.xpose.msra.mxu0 %v105
    %128 = vmatpush.xpose.msra.mxu0 %v102
    %129 = vmatmul.f32.gmra.mxu0 %v96
    %v130 = vpop.f32.mrf.mxu0
    %v131 = vadd.f32 %v93, %v130
    %132 = vmatmul.f32.gmra.mxu0 %v99
    %v133 = vpop.f32.mrf.mxu0
    %v134 = vadd.f32 %v93, %v133
    %135 = vdwg.mxu0
    %v136 = vld [vmem:[%s2] sm:$0xff]
    %v137 = vld [vmem:[%s2 + $0x8] sm:$0xff]
    %138 = vrot.lane.b32.xlu0 %v46, 64
    %v139 = vpop.permute.xlu0 %138
    %v142 = vsel %vm48, %v136, 0
    %v145 = vsel %vm48, %v137, 0
    %v148 = vsel %vm48, %v38, 0
    %v151 = vsel %vm48, %v39, 0
    %v154 = vsel %vm48, %v40, 0
    %v157 = vsel %vm48, %v41, 0
    %159 = vmatpush.xpose.msra.mxu0 0.0
    %160 = vmatpush.xpose.msra.mxu0 0.0
    %161 = vmatpush.xpose.msra.mxu0 0.0
    %162 = vmatpush.xpose.msra.mxu0 0.0
    %163 = vmatpush.xpose.msra.mxu0 0.0
    %164 = vmatpush.xpose.msra.mxu0 0.0
    %165 = vmatpush.xpose.msra.mxu0 0.0
    %166 = vmatpush.xpose.msra.mxu0 0.0
    %167 = vmatpush.xpose.msra.mxu0 0.0
    %168 = vmatpush.xpose.msra.mxu0 0.0
    %169 = vmatpush.xpose.msra.mxu0 0.0
    %170 = vmatpush.xpose.msra.mxu0 0.0
    %171 = vmatpush.xpose.msra.mxu0 %v157
    %172 = vmatpush.xpose.msra.mxu0 %v154
    %173 = vmatpush.xpose.msra.mxu0 %v151
    %174 = vmatpush.xpose.msra.mxu0 %v148
    %175 = vmatmul.f32.gmra.mxu0 %v142
    %v176 = vpop.f32.mrf.mxu0
    %v177 = vadd.f32 %v139, %v176
    %178 = vmatmul.f32.gmra.mxu0 %v145
    %v179 = vpop.f32.mrf.mxu0
    %v180 = vadd.f32 %v139, %v179
    %181 = vdwg.mxu0
    %vm182 = vcmask 64512
    %v184 = vsel %vm182, %v85, 0
    %v187 = vsel %vm182, %v131, 0
    %189 = vmatpush.xpose.msra.mxu0 0.0
    %190 = vmatpush.xpose.msra.mxu0 0.0
    %191 = vmatpush.xpose.msra.mxu0 0.0
    %192 = vmatpush.xpose.msra.mxu0 0.0
    %193 = vmatpush.xpose.msra.mxu0 0.0
    %194 = vmatpush.xpose.msra.mxu0 0.0
    %195 = vmatpush.xpose.msra.mxu0 0.0
    %196 = vmatpush.xpose.msra.mxu0 0.0
    %197 = vmatpush.xpose.msra.mxu0 0.0
    %198 = vmatpush.xpose.msra.mxu0 0.0
    %199 = vmatpush.xpose.msra.mxu0 0.0
    %200 = vmatpush.xpose.msra.mxu0 0.0
    %201 = vmatpush.xpose.msra.mxu0 0.0
    %202 = vmatpush.xpose.msra.mxu0 0.0
    %203 = vmatpush.xpose.msra.mxu0 0.0
    %204 = vmatpush.xpose.msra.mxu0 %v187
    %205 = vmatmul.f32.gmra.mxu0 %v184
    %v206 = vpop.f32.mrf.mxu0
    %v207 = vadd.f32 0.0, %v206
    %208 = vdwg.mxu0
    %v210 = vsel %vm182, %v88, 0
    %v213 = vsel %vm182, %v134, 0
    %215 = vmatpush.xpose.msra.mxu0 0.0
    %216 = vmatpush.xpose.msra.mxu0 0.0
    %217 = vmatpush.xpose.msra.mxu0 0.0
    %218 = vmatpush.xpose.msra.mxu0 0.0
    %219 = vmatpush.xpose.msra.mxu0 0.0
    %220 = vmatpush.xpose.msra.mxu0 0.0
    %221 = vmatpush.xpose.msra.mxu0 0.0
    %222 = vmatpush.xpose.msra.mxu0 0.0
    %223 = vmatpush.xpose.msra.mxu0 0.0
    %224 = vmatpush.xpose.msra.mxu0 0.0
    %225 = vmatpush.xpose.msra.mxu0 0.0
    %226 = vmatpush.xpose.msra.mxu0 0.0
    %227 = vmatpush.xpose.msra.mxu0 0.0
    %228 = vmatpush.xpose.msra.mxu0 0.0
    %229 = vmatpush.xpose.msra.mxu0 0.0
    %230 = vmatpush.xpose.msra.mxu0 %v213
    %231 = vmatmul.f32.gmra.mxu0 %v210
    %v232 = vpop.f32.mrf.mxu0
    %v233 = vadd.f32 0.0, %v232
    %234 = vdwg.mxu0
    %v235 = vsel %vm182, %v207, -inf
    %236 = vmax.xlane.f32.xlu0 %v235
    %v237 = vpop.xlane.xlu0 %236
    %v238 = vsel %vm182, %v233, -inf
    %239 = vmax.xlane.f32.xlu0 %v238
    %v240 = vpop.xlane.xlu0 %239
    %v241 = vsub.f32 %v207, %v237
    %v242 = vsub.f32 %v233, %v240
    %v243 = vmul.f32 %v241, 1.442695
    %v244 = vpow.pop %v243
    %v245 = vmul.f32 %v242, 1.442695
    %v246 = vpow.pop %v245
    %v247 = vsel %vm182, %v244, 0.0
    %248 = vadd.xlane.f32.xlu0 %v247
    %v249 = vpop.xlane.xlu0 %248
    %v250 = vsel %vm182, %v246, 0.0
    %251 = vadd.xlane.f32.xlu0 %v250
    %v252 = vpop.xlane.xlu0 %251
    %v253 = vrcp.pop %v249
    %v254 = vrcp.pop %v252
    %v255 = vmul.f32 %v244, %v253
    %v256 = vmul.f32 %v246, %v254
    %v257 = vrcp.pop %v249
    %v258 = vmul.f32 %v249, %v257
    %v259 = vsub.f32 1.0, %v258
    %v260 = vmul.f32 %v257, %v259
    %v261 = vadd.f32 %v257, %v260
    %vm262 = vweird.f32 %v249
    %vm263 = vweird.f32 %v257
    %vm264 = vmor %vm262, %vm263
    %v265 = vsel %vm264, %v257, %v261
    %v266 = vand.u32 2147483647, %v249
    %vm267 = vcmp.eq.f32.partialorder %v266, 8.507059e+37
    %v268 = vand.u32 %v249, 2147483648
    %v269 = vor.u32 1.1754944e-38, %v268
    %v270 = vsel %vm267, %v269, %v265
    %v271 = vmul.f32 %v244, %v270
    %v272 = vrcp.pop %v252
    %v273 = vmul.f32 %v252, %v272
    %v274 = vsub.f32 1.0, %v273
    %v275 = vmul.f32 %v272, %v274
    %v276 = vadd.f32 %v272, %v275
    %vm277 = vweird.f32 %v252
    %vm278 = vweird.f32 %v272
    %vm279 = vmor %vm277, %vm278
    %v280 = vsel %vm279, %v272, %v276
    %v281 = vand.u32 2147483647, %v252
    %vm282 = vcmp.eq.f32.partialorder %v281, 8.507059e+37
    %v283 = vand.u32 %v252, 2147483648
    %v284 = vor.u32 1.1754944e-38, %v283
    %v285 = vsel %vm282, %v284, %v280
    %v286 = vmul.f32 %v246, %v285
    %287 = vst.msk [vmem:[#allocation5] sm:$0xff] %vm182, %v271
    %288 = vst.msk [vmem:[#allocation5 + $0x20] sm:$0xff] %vm182, %v286
    %v290 = vsel %vm182, %v255, 0
    %292 = vmatpush.msra.mxu0 0.0
    %293 = vmatpush.msra.mxu0 0.0
    %294 = vmatpush.msra.mxu0 0.0
    %295 = vmatpush.msra.mxu0 0.0
    %296 = vmatpush.msra.mxu0 0.0
    %297 = vmatpush.msra.mxu0 0.0
    %298 = vmatpush.msra.mxu0 0.0
    %299 = vmatpush.msra.mxu0 0.0
    %300 = vmatpush.msra.mxu0 0.0
    %301 = vmatpush.msra.mxu0 0.0
    %302 = vmatpush.msra.mxu0 0.0
    %303 = vmatpush.msra.mxu0 0.0
    %304 = vmatpush.msra.mxu0 0.0
    %305 = vmatpush.msra.mxu0 0.0
    %306 = vmatpush.msra.mxu0 0.0
    %307 = vmatpush.msra.mxu0 %v177
    %308 = vmatmul.f32.gmra.mxu0 %v290
    %v309 = vpop.f32.mrf.mxu0
    %v310 = vadd.f32 0.0, %v309
    %311 = vdwg.mxu0
    %v313 = vsel %vm182, %v256, 0
    %315 = vmatpush.msra.mxu0 0.0
    %316 = vmatpush.msra.mxu0 0.0
    %317 = vmatpush.msra.mxu0 0.0
    %318 = vmatpush.msra.mxu0 0.0
    %319 = vmatpush.msra.mxu0 0.0
    %320 = vmatpush.msra.mxu0 0.0
    %321 = vmatpush.msra.mxu0 0.0
    %322 = vmatpush.msra.mxu0 0.0
    %323 = vmatpush.msra.mxu0 0.0
    %324 = vmatpush.msra.mxu0 0.0
    %325 = vmatpush.msra.mxu0 0.0
    %326 = vmatpush.msra.mxu0 0.0
    %327 = vmatpush.msra.mxu0 0.0
    %328 = vmatpush.msra.mxu0 0.0
    %329 = vmatpush.msra.mxu0 0.0
    %330 = vmatpush.msra.mxu0 %v180
    %331 = vmatmul.f32.gmra.mxu0 %v313
    %v332 = vpop.f32.mrf.mxu0
    %v333 = vadd.f32 0.0, %v332
    %334 = vdwg.mxu0
    %335 = vst.msk [vmem:[#allocation2] sm:$0xff] %vm182, %v310
    %336 = vst.msk [vmem:[#allocation2 + $0x8] sm:$0xff] %vm182, %v333
    %337 = vrot.lane.b32.xlu0 %v85, 120
    %v338 = vpop.permute.xlu0 %337
    %339 = vrot.lane.b32.xlu0 %v131, 120
    %v340 = vpop.permute.xlu0 %339
    %v341 = vsel %vm182, %v338, 0
    %v343 = vsel %vm182, %v340, 0
    %345 = vmatpush.xpose.msra.mxu0 0.0
    %346 = vmatpush.xpose.msra.mxu0 0.0
    %347 = vmatpush.xpose.msra.mxu0 0.0
    %348 = vmatpush.xpose.msra.mxu0 0.0
    %349 = vmatpush.xpose.msra.mxu0 0.0
    %350 = vmatpush.xpose.msra.mxu0 0.0
    %351 = vmatpush.xpose.msra.mxu0 0.0
    %352 = vmatpush.xpose.msra.mxu0 0.0
    %353 = vmatpush.xpose.msra.mxu0 0.0
    %354 = vmatpush.xpose.msra.mxu0 0.0
    %355 = vmatpush.xpose.msra.mxu0 0.0
    %356 = vmatpush.xpose.msra.mxu0 0.0
    %357 = vmatpush.xpose.msra.mxu0 0.0
    %358 = vmatpush.xpose.msra.mxu0 0.0
    %359 = vmatpush.xpose.msra.mxu0 0.0
    %360 = vmatpush.xpose.msra.mxu0 %v343
    %361 = vmatmul.f32.gmra.mxu0 %v341
    %v362 = vpop.f32.mrf.mxu0
    %v363 = vadd.f32 0.0, %v362
    %364 = vdwg.mxu0
    %365 = vrot.lane.b32.xlu0 %v88, 120
    %v366 = vpop.permute.xlu0 %365
    %367 = vrot.lane.b32.xlu0 %v134, 120
    %v368 = vpop.permute.xlu0 %367
    %v369 = vsel %vm182, %v366, 0
    %v371 = vsel %vm182, %v368, 0
    %373 = vmatpush.xpose.msra.mxu0 0.0
    %374 = vmatpush.xpose.msra.mxu0 0.0
    %375 = vmatpush.xpose.msra.mxu0 0.0
    %376 = vmatpush.xpose.msra.mxu0 0.0
    %377 = vmatpush.xpose.msra.mxu0 0.0
    %378 = vmatpush.xpose.msra.mxu0 0.0
    %379 = vmatpush.xpose.msra.mxu0 0.0
    %380 = vmatpush.xpose.msra.mxu0 0.0
    %381 = vmatpush.xpose.msra.mxu0 0.0
    %382 = vmatpush.xpose.msra.mxu0 0.0
    %383 = vmatpush.xpose.msra.mxu0 0.0
    %384 = vmatpush.xpose.msra.mxu0 0.0
    %385 = vmatpush.xpose.msra.mxu0 0.0
    %386 = vmatpush.xpose.msra.mxu0 0.0
    %387 = vmatpush.xpose.msra.mxu0 0.0
    %388 = vmatpush.xpose.msra.mxu0 %v371
    %389 = vmatmul.f32.gmra.mxu0 %v369
    %v390 = vpop.f32.mrf.mxu0
    %v391 = vadd.f32 0.0, %v390
    %392 = vdwg.mxu0
    %v393 = vsel %vm182, %v363, -inf
    %394 = vmax.xlane.f32.xlu0 %v393
    %v395 = vpop.xlane.xlu0 %394
    %v396 = vsel %vm182, %v391, -inf
    %397 = vmax.xlane.f32.xlu0 %v396
    %v398 = vpop.xlane.xlu0 %397
    %v399 = vsub.f32 %v363, %v395
    %v400 = vsub.f32 %v391, %v398
    %v401 = vmul.f32 %v399, 1.442695
    %v402 = vpow.pop %v401
    %v403 = vmul.f32 %v400, 1.442695
    %v404 = vpow.pop %v403
    %v405 = vsel %vm182, %v402, 0.0
    %406 = vadd.xlane.f32.xlu0 %v405
    %v407 = vpop.xlane.xlu0 %406
    %v408 = vsel %vm182, %v404, 0.0
    %409 = vadd.xlane.f32.xlu0 %v408
    %v410 = vpop.xlane.xlu0 %409
    %v411 = vrcp.pop %v407
    %v412 = vrcp.pop %v410
    %v413 = vmul.f32 %v402, %v411
    %v414 = vmul.f32 %v404, %v412
    %v415 = vrcp.pop %v407
    %v416 = vmul.f32 %v407, %v415
    %v417 = vsub.f32 1.0, %v416
    %v418 = vmul.f32 %v415, %v417
    %v419 = vadd.f32 %v415, %v418
    %vm420 = vweird.f32 %v407
    %vm421 = vweird.f32 %v415
    %vm422 = vmor %vm420, %vm421
    %v423 = vsel %vm422, %v415, %v419
    %v424 = vand.u32 2147483647, %v407
    %vm425 = vcmp.eq.f32.partialorder %v424, 8.507059e+37
    %v426 = vand.u32 %v407, 2147483648
    %v427 = vor.u32 1.1754944e-38, %v426
    %v428 = vsel %vm425, %v427, %v423
    %v429 = vmul.f32 %v402, %v428
    %v430 = vrcp.pop %v410
    %v431 = vmul.f32 %v410, %v430
    %v432 = vsub.f32 1.0, %v431
    %v433 = vmul.f32 %v430, %v432
    %v434 = vadd.f32 %v430, %v433
    %vm435 = vweird.f32 %v410
    %vm436 = vweird.f32 %v430
    %vm437 = vmor %vm435, %vm436
    %v438 = vsel %vm437, %v430, %v434
    %v439 = vand.u32 2147483647, %v410
    %vm440 = vcmp.eq.f32.partialorder %v439, 8.507059e+37
    %v441 = vand.u32 %v410, 2147483648
    %v442 = vor.u32 1.1754944e-38, %v441
    %v443 = vsel %vm440, %v442, %v438
    %v444 = vmul.f32 %v404, %v443
    %s445 = scalar_lea.vmem [#allocation5], 8
    %446 = vst.msk [vmem:[%s445] sm:$0xff] %vm182, %v429
    %447 = vst.msk [vmem:[%s445 + $0x20] sm:$0xff] %vm182, %v444
    %449 = vrot.lane.b32.xlu0 %v177, 120
    %v450 = vpop.permute.xlu0 %449
    %v453 = vsel %vm182, %v413, 0
    %455 = vmatpush.msra.mxu0 0.0
    %456 = vmatpush.msra.mxu0 0.0
    %457 = vmatpush.msra.mxu0 0.0
    %458 = vmatpush.msra.mxu0 0.0
    %459 = vmatpush.msra.mxu0 0.0
    %460 = vmatpush.msra.mxu0 0.0
    %461 = vmatpush.msra.mxu0 0.0
    %462 = vmatpush.msra.mxu0 0.0
    %463 = vmatpush.msra.mxu0 0.0
    %464 = vmatpush.msra.mxu0 0.0
    %465 = vmatpush.msra.mxu0 0.0
    %466 = vmatpush.msra.mxu0 0.0
    %467 = vmatpush.msra.mxu0 0.0
    %468 = vmatpush.msra.mxu0 0.0
    %469 = vmatpush.msra.mxu0 0.0
    %470 = vmatpush.msra.mxu0 %v450
    %471 = vmatmul.f32.gmra.mxu0 %v453
    %v472 = vpop.f32.mrf.mxu0
    %v473 = vadd.f32 0.0, %v472
    %474 = vdwg.mxu0
    %476 = vrot.lane.b32.xlu0 %v180, 120
    %v477 = vpop.permute.xlu0 %476
    %v480 = vsel %vm182, %v414, 0
    %482 = vmatpush.msra.mxu0 0.0
    %483 = vmatpush.msra.mxu0 0.0
    %484 = vmatpush.msra.mxu0 0.0
    %485 = vmatpush.msra.mxu0 0.0
    %486 = vmatpush.msra.mxu0 0.0
    %487 = vmatpush.msra.mxu0 0.0
    %488 = vmatpush.msra.mxu0 0.0
    %489 = vmatpush.msra.mxu0 0.0
    %490 = vmatpush.msra.mxu0 0.0
    %491 = vmatpush.msra.mxu0 0.0
    %492 = vmatpush.msra.mxu0 0.0
    %493 = vmatpush.msra.mxu0 0.0
    %494 = vmatpush.msra.mxu0 0.0
    %495 = vmatpush.msra.mxu0 0.0
    %496 = vmatpush.msra.mxu0 0.0
    %497 = vmatpush.msra.mxu0 %v477
    %498 = vmatmul.f32.gmra.mxu0 %v480
    %v499 = vpop.f32.mrf.mxu0
    %v500 = vadd.f32 0.0, %v499
    %501 = vdwg.mxu0
    %504 = vrot.lane.b32.xlu0 %v473, 8
    %v505 = vpop.permute.xlu0 %504
    %506 = vrot.lane.b32.xlu0 %v500, 8
    %v507 = vpop.permute.xlu0 %506
    %vm510 = vcmask 130112
    %511 = vst.msk [vmem:[#allocation2] sm:$0xff] %vm510, %v505
    %512 = vst.msk [vmem:[#allocation2 + $0x8] sm:$0xff] %vm510, %v507
    %513 = vrot.lane.b32.xlu0 %v85, 112
    %v514 = vpop.permute.xlu0 %513
    %515 = vrot.lane.b32.xlu0 %v131, 112
    %v516 = vpop.permute.xlu0 %515
    %v517 = vsel %vm182, %v514, 0
    %v519 = vsel %vm182, %v516, 0
    %521 = vmatpush.xpose.msra.mxu0 0.0
    %522 = vmatpush.xpose.msra.mxu0 0.0
    %523 = vmatpush.xpose.msra.mxu0 0.0
    %524 = vmatpush.xpose.msra.mxu0 0.0
    %525 = vmatpush.xpose.msra.mxu0 0.0
    %526 = vmatpush.xpose.msra.mxu0 0.0
    %527 = vmatpush.xpose.msra.mxu0 0.0
    %528 = vmatpush.xpose.msra.mxu0 0.0
    %529 = vmatpush.xpose.msra.mxu0 0.0
    %530 = vmatpush.xpose.msra.mxu0 0.0
    %531 = vmatpush.xpose.msra.mxu0 0.0
    %532 = vmatpush.xpose.msra.mxu0 0.0
    %533 = vmatpush.xpose.msra.mxu0 0.0
    %534 = vmatpush.xpose.msra.mxu0 0.0
    %535 = vmatpush.xpose.msra.mxu0 0.0
    %536 = vmatpush.xpose.msra.mxu0 %v519
    %537 = vmatmul.f32.gmra.mxu0 %v517
    %v538 = vpop.f32.mrf.mxu0
    %v539 = vadd.f32 0.0, %v538
    %540 = vdwg.mxu0
    %541 = vrot.lane.b32.xlu0 %v88, 112
    %v542 = vpop.permute.xlu0 %541
    %543 = vrot.lane.b32.xlu0 %v134, 112
    %v544 = vpop.permute.xlu0 %543
    %v545 = vsel %vm182, %v542, 0
    %v547 = vsel %vm182, %v544, 0
    %549 = vmatpush.xpose.msra.mxu0 0.0
    %550 = vmatpush.xpose.msra.mxu0 0.0
    %551 = vmatpush.xpose.msra.mxu0 0.0
    %552 = vmatpush.xpose.msra.mxu0 0.0
    %553 = vmatpush.xpose.msra.mxu0 0.0
    %554 = vmatpush.xpose.msra.mxu0 0.0
    %555 = vmatpush.xpose.msra.mxu0 0.0
    %556 = vmatpush.xpose.msra.mxu0 0.0
    %557 = vmatpush.xpose.msra.mxu0 0.0
    %558 = vmatpush.xpose.msra.mxu0 0.0
    %559 = vmatpush.xpose.msra.mxu0 0.0
    %560 = vmatpush.xpose.msra.mxu0 0.0
    %561 = vmatpush.xpose.msra.mxu0 0.0
    %562 = vmatpush.xpose.msra.mxu0 0.0
    %563 = vmatpush.xpose.msra.mxu0 0.0
    %564 = vmatpush.xpose.msra.mxu0 %v547
    %565 = vmatmul.f32.gmra.mxu0 %v545
    %v566 = vpop.f32.mrf.mxu0
    %v567 = vadd.f32 0.0, %v566
    %568 = vdwg.mxu0
    %v569 = vsel %vm182, %v539, -inf
    %570 = vmax.xlane.f32.xlu0 %v569
    %v571 = vpop.xlane.xlu0 %570
    %v572 = vsel %vm182, %v567, -inf
    %573 = vmax.xlane.f32.xlu0 %v572
    %v574 = vpop.xlane.xlu0 %573
    %v575 = vsub.f32 %v539, %v571
    %v576 = vsub.f32 %v567, %v574
    %v577 = vmul.f32 %v575, 1.442695
    %v578 = vpow.pop %v577
    %v579 = vmul.f32 %v576, 1.442695
    %v580 = vpow.pop %v579
    %v581 = vsel %vm182, %v578, 0.0
    %582 = vadd.xlane.f32.xlu0 %v581
    %v583 = vpop.xlane.xlu0 %582
    %v584 = vsel %vm182, %v580, 0.0
    %585 = vadd.xlane.f32.xlu0 %v584
    %v586 = vpop.xlane.xlu0 %585
    %v587 = vrcp.pop %v583
    %v588 = vrcp.pop %v586
    %v589 = vmul.f32 %v578, %v587
    %v590 = vmul.f32 %v580, %v588
    %v591 = vrcp.pop %v583
    %v592 = vmul.f32 %v583, %v591
    %v593 = vsub.f32 1.0, %v592
    %v594 = vmul.f32 %v591, %v593
    %v595 = vadd.f32 %v591, %v594
    %vm596 = vweird.f32 %v583
    %vm597 = vweird.f32 %v591
    %vm598 = vmor %vm596, %vm597
    %v599 = vsel %vm598, %v591, %v595
    %v600 = vand.u32 2147483647, %v583
    %vm601 = vcmp.eq.f32.partialorder %v600, 8.507059e+37
    %v602 = vand.u32 %v583, 2147483648
    %v603 = vor.u32 1.1754944e-38, %v602
    %v604 = vsel %vm601, %v603, %v599
    %v605 = vmul.f32 %v578, %v604
    %v606 = vrcp.pop %v586
    %v607 = vmul.f32 %v586, %v606
    %v608 = vsub.f32 1.0, %v607
    %v609 = vmul.f32 %v606, %v608
    %v610 = vadd.f32 %v606, %v609
    %vm611 = vweird.f32 %v586
    %vm612 = vweird.f32 %v606
    %vm613 = vmor %vm611, %vm612
    %v614 = vsel %vm613, %v606, %v610
    %v615 = vand.u32 2147483647, %v586
    %vm616 = vcmp.eq.f32.partialorder %v615, 8.507059e+37
    %v617 = vand.u32 %v586, 2147483648
    %v618 = vor.u32 1.1754944e-38, %v617
    %v619 = vsel %vm616, %v618, %v614
    %v620 = vmul.f32 %v580, %v619
    %s621 = scalar_lea.vmem [#allocation5], 16
    %622 = vst.msk [vmem:[%s621] sm:$0xff] %vm182, %v605
    %623 = vst.msk [vmem:[%s621 + $0x20] sm:$0xff] %vm182, %v620
    %624 = vrot.lane.b32.xlu0 %v177, 112
    %v625 = vpop.permute.xlu0 %624
    %v628 = vsel %vm182, %v589, 0
    %630 = vmatpush.msra.mxu0 0.0
    %631 = vmatpush.msra.mxu0 0.0
    %632 = vmatpush.msra.mxu0 0.0
    %633 = vmatpush.msra.mxu0 0.0
    %634 = vmatpush.msra.mxu0 0.0
    %635 = vmatpush.msra.mxu0 0.0
    %636 = vmatpush.msra.mxu0 0.0
    %637 = vmatpush.msra.mxu0 0.0
    %638 = vmatpush.msra.mxu0 0.0
    %639 = vmatpush.msra.mxu0 0.0
    %640 = vmatpush.msra.mxu0 0.0
    %641 = vmatpush.msra.mxu0 0.0
    %642 = vmatpush.msra.mxu0 0.0
    %643 = vmatpush.msra.mxu0 0.0
    %644 = vmatpush.msra.mxu0 0.0
    %645 = vmatpush.msra.mxu0 %v625
    %646 = vmatmul.f32.gmra.mxu0 %v628
    %v647 = vpop.f32.mrf.mxu0
    %v648 = vadd.f32 0.0, %v647
    %649 = vdwg.mxu0
    %650 = vrot.lane.b32.xlu0 %v180, 112
    %v651 = vpop.permute.xlu0 %650
    %v654 = vsel %vm182, %v590, 0
    %656 = vmatpush.msra.mxu0 0.0
    %657 = vmatpush.msra.mxu0 0.0
    %658 = vmatpush.msra.mxu0 0.0
    %659 = vmatpush.msra.mxu0 0.0
    %660 = vmatpush.msra.mxu0 0.0
    %661 = vmatpush.msra.mxu0 0.0
    %662 = vmatpush.msra.mxu0 0.0
    %663 = vmatpush.msra.mxu0 0.0
    %664 = vmatpush.msra.mxu0 0.0
    %665 = vmatpush.msra.mxu0 0.0
    %666 = vmatpush.msra.mxu0 0.0
    %667 = vmatpush.msra.mxu0 0.0
    %668 = vmatpush.msra.mxu0 0.0
    %669 = vmatpush.msra.mxu0 0.0
    %670 = vmatpush.msra.mxu0 0.0
    %671 = vmatpush.msra.mxu0 %v651
    %672 = vmatmul.f32.gmra.mxu0 %v654
    %v673 = vpop.f32.mrf.mxu0
    %v674 = vadd.f32 0.0, %v673
    %675 = vdwg.mxu0
    %678 = vrot.lane.b32.xlu0 %v648, 16
    %v679 = vpop.permute.xlu0 %678
    %680 = vrot.lane.b32.xlu0 %v674, 16
    %v681 = vpop.permute.xlu0 %680
    %vm684 = vcmask 195712
    %685 = vst.msk [vmem:[#allocation2] sm:$0xff] %vm684, %v679
    %686 = vst.msk [vmem:[#allocation2 + $0x8] sm:$0xff] %vm684, %v681
    %687 = vrot.lane.b32.xlu0 %v85, 104
    %v688 = vpop.permute.xlu0 %687
    %689 = vrot.lane.b32.xlu0 %v131, 104
    %v690 = vpop.permute.xlu0 %689
    %v691 = vsel %vm182, %v688, 0
    %v693 = vsel %vm182, %v690, 0
    %695 = vmatpush.xpose.msra.mxu0 0.0
    %696 = vmatpush.xpose.msra.mxu0 0.0
    %697 = vmatpush.xpose.msra.mxu0 0.0
    %698 = vmatpush.xpose.msra.mxu0 0.0
    %699 = vmatpush.xpose.msra.mxu0 0.0
    %700 = vmatpush.xpose.msra.mxu0 0.0
    %701 = vmatpush.xpose.msra.mxu0 0.0
    %702 = vmatpush.xpose.msra.mxu0 0.0
    %703 = vmatpush.xpose.msra.mxu0 0.0
    %704 = vmatpush.xpose.msra.mxu0 0.0
    %705 = vmatpush.xpose.msra.mxu0 0.0
    %706 = vmatpush.xpose.msra.mxu0 0.0
    %707 = vmatpush.xpose.msra.mxu0 0.0
    %708 = vmatpush.xpose.msra.mxu0 0.0
    %709 = vmatpush.xpose.msra.mxu0 0.0
    %710 = vmatpush.xpose.msra.mxu0 %v693
    %711 = vmatmul.f32.gmra.mxu0 %v691
    %v712 = vpop.f32.mrf.mxu0
    %v713 = vadd.f32 0.0, %v712
    %714 = vdwg.mxu0
    %715 = vrot.lane.b32.xlu0 %v88, 104
    %v716 = vpop.permute.xlu0 %715
    %717 = vrot.lane.b32.xlu0 %v134, 104
    %v718 = vpop.permute.xlu0 %717
    %v719 = vsel %vm182, %v716, 0
    %v721 = vsel %vm182, %v718, 0
    %723 = vmatpush.xpose.msra.mxu0 0.0
    %724 = vmatpush.xpose.msra.mxu0 0.0
    %725 = vmatpush.xpose.msra.mxu0 0.0
    %726 = vmatpush.xpose.msra.mxu0 0.0
    %727 = vmatpush.xpose.msra.mxu0 0.0
    %728 = vmatpush.xpose.msra.mxu0 0.0
    %729 = vmatpush.xpose.msra.mxu0 0.0
    %730 = vmatpush.xpose.msra.mxu0 0.0
    %731 = vmatpush.xpose.msra.mxu0 0.0
    %732 = vmatpush.xpose.msra.mxu0 0.0
    %733 = vmatpush.xpose.msra.mxu0 0.0
    %734 = vmatpush.xpose.msra.mxu0 0.0
    %735 = vmatpush.xpose.msra.mxu0 0.0
    %736 = vmatpush.xpose.msra.mxu0 0.0
    %737 = vmatpush.xpose.msra.mxu0 0.0
    %738 = vmatpush.xpose.msra.mxu0 %v721
    %739 = vmatmul.f32.gmra.mxu0 %v719
    %v740 = vpop.f32.mrf.mxu0
    %v741 = vadd.f32 0.0, %v740
    %742 = vdwg.mxu0
    %v743 = vsel %vm182, %v713, -inf
    %744 = vmax.xlane.f32.xlu0 %v743
    %v745 = vpop.xlane.xlu0 %744
    %v746 = vsel %vm182, %v741, -inf
    %747 = vmax.xlane.f32.xlu0 %v746
    %v748 = vpop.xlane.xlu0 %747
    %v749 = vsub.f32 %v713, %v745
    %v750 = vsub.f32 %v741, %v748
    %v751 = vmul.f32 %v749, 1.442695
    %v752 = vpow.pop %v751
    %v753 = vmul.f32 %v750, 1.442695
    %v754 = vpow.pop %v753
    %v755 = vsel %vm182, %v752, 0.0
    %756 = vadd.xlane.f32.xlu0 %v755
    %v757 = vpop.xlane.xlu0 %756
    %v758 = vsel %vm182, %v754, 0.0
    %759 = vadd.xlane.f32.xlu0 %v758
    %v760 = vpop.xlane.xlu0 %759
    %v761 = vrcp.pop %v757
    %v762 = vrcp.pop %v760
    %v763 = vmul.f32 %v752, %v761
    %v764 = vmul.f32 %v754, %v762
    %v765 = vrcp.pop %v757
    %v766 = vmul.f32 %v757, %v765
    %v767 = vsub.f32 1.0, %v766
    %v768 = vmul.f32 %v765, %v767
    %v769 = vadd.f32 %v765, %v768
    %vm770 = vweird.f32 %v757
    %vm771 = vweird.f32 %v765
    %vm772 = vmor %vm770, %vm771
    %v773 = vsel %vm772, %v765, %v769
    %v774 = vand.u32 2147483647, %v757
    %vm775 = vcmp.eq.f32.partialorder %v774, 8.507059e+37
    %v776 = vand.u32 %v757, 2147483648
    %v777 = vor.u32 1.1754944e-38, %v776
    %v778 = vsel %vm775, %v777, %v773
    %v779 = vmul.f32 %v752, %v778
    %v780 = vrcp.pop %v760
    %v781 = vmul.f32 %v760, %v780
    %v782 = vsub.f32 1.0, %v781
    %v783 = vmul.f32 %v780, %v782
    %v784 = vadd.f32 %v780, %v783
    %vm785 = vweird.f32 %v760
    %vm786 = vweird.f32 %v780
    %vm787 = vmor %vm785, %vm786
    %v788 = vsel %vm787, %v780, %v784
    %v789 = vand.u32 2147483647, %v760
    %vm790 = vcmp.eq.f32.partialorder %v789, 8.507059e+37
    %v791 = vand.u32 %v760, 2147483648
    %v792 = vor.u32 1.1754944e-38, %v791
    %v793 = vsel %vm790, %v792, %v788
    %v794 = vmul.f32 %v754, %v793
    %s795 = scalar_lea.vmem [#allocation5], 24
    %796 = vst.msk [vmem:[%s795] sm:$0xff] %vm182, %v779
    %797 = vst.msk [vmem:[%s795 + $0x20] sm:$0xff] %vm182, %v794
    %798 = vrot.lane.b32.xlu0 %v177, 104
    %v799 = vpop.permute.xlu0 %798
    %v802 = vsel %vm182, %v763, 0
    %804 = vmatpush.msra.mxu0 0.0
    %805 = vmatpush.msra.mxu0 0.0
    %806 = vmatpush.msra.mxu0 0.0
    %807 = vmatpush.msra.mxu0 0.0
    %808 = vmatpush.msra.mxu0 0.0
    %809 = vmatpush.msra.mxu0 0.0
    %810 = vmatpush.msra.mxu0 0.0
    %811 = vmatpush.msra.mxu0 0.0
    %812 = vmatpush.msra.mxu0 0.0
    %813 = vmatpush.msra.mxu0 0.0
    %814 = vmatpush.msra.mxu0 0.0
    %815 = vmatpush.msra.mxu0 0.0
    %816 = vmatpush.msra.mxu0 0.0
    %817 = vmatpush.msra.mxu0 0.0
    %818 = vmatpush.msra.mxu0 0.0
    %819 = vmatpush.msra.mxu0 %v799
    %820 = vmatmul.f32.gmra.mxu0 %v802
    %v821 = vpop.f32.mrf.mxu0
    %v822 = vadd.f32 0.0, %v821
    %823 = vdwg.mxu0
    %824 = vrot.lane.b32.xlu0 %v180, 104
    %v825 = vpop.permute.xlu0 %824
    %v828 = vsel %vm182, %v764, 0
    %830 = vmatpush.msra.mxu0 0.0
    %831 = vmatpush.msra.mxu0 0.0
    %832 = vmatpush.msra.mxu0 0.0
    %833 = vmatpush.msra.mxu0 0.0
    %834 = vmatpush.msra.mxu0 0.0
    %835 = vmatpush.msra.mxu0 0.0
    %836 = vmatpush.msra.mxu0 0.0
    %837 = vmatpush.msra.mxu0 0.0
    %838 = vmatpush.msra.mxu0 0.0
    %839 = vmatpush.msra.mxu0 0.0
    %840 = vmatpush.msra.mxu0 0.0
    %841 = vmatpush.msra.mxu0 0.0
    %842 = vmatpush.msra.mxu0 0.0
    %843 = vmatpush.msra.mxu0 0.0
    %844 = vmatpush.msra.mxu0 0.0
    %845 = vmatpush.msra.mxu0 %v825
    %846 = vmatmul.f32.gmra.mxu0 %v828
    %v847 = vpop.f32.mrf.mxu0
    %v848 = vadd.f32 0.0, %v847
    %849 = vdwg.mxu0
    %852 = vrot.lane.b32.xlu0 %v822, 24
    %v853 = vpop.permute.xlu0 %852
    %854 = vrot.lane.b32.xlu0 %v848, 24
    %v855 = vpop.permute.xlu0 %854
    %vm858 = vcmask 261312
    %859 = vst.msk [vmem:[#allocation2] sm:$0xff] %vm858, %v853
    %860 = vst.msk [vmem:[#allocation2 + $0x8] sm:$0xff] %vm858, %v855
    %v861 = vld [vmem:[#allocation2] sm:$0xff]
    %v862 = vld [vmem:[#allocation2 + $0x8] sm:$0xff]
    %v863 = vld [vmem:[%s5] sm:$0xff]
    %v864 = vld [vmem:[%s5 + $0x8] sm:$0xff]
    %v865 = vld [vmem:[%s5 + $0x10] sm:$0xff]
    %v866 = vld [vmem:[%s5 + $0x18] sm:$0xff]
    %v867 = vld [vmem:[%s6] sm:$0x1]
    %v869 = vperm.slane %v867, 0
    %v872 = vsel %vm48, %v861, 0
    %v875 = vsel %vm48, %v862, 0
    %v878 = vsel %vm48, %v863, 0
    %v881 = vsel %vm48, %v864, 0
    %v884 = vsel %vm48, %v865, 0
    %v887 = vsel %vm48, %v866, 0
    %889 = vmatpush.xpose.msra.mxu0 0.0
    %890 = vmatpush.xpose.msra.mxu0 0.0
    %891 = vmatpush.xpose.msra.mxu0 0.0
    %892 = vmatpush.xpose.msra.mxu0 0.0
    %893 = vmatpush.xpose.msra.mxu0 0.0
    %894 = vmatpush.xpose.msra.mxu0 0.0
    %895 = vmatpush.xpose.msra.mxu0 0.0
    %896 = vmatpush.xpose.msra.mxu0 0.0
    %897 = vmatpush.xpose.msra.mxu0 0.0
    %898 = vmatpush.xpose.msra.mxu0 0.0
    %899 = vmatpush.xpose.msra.mxu0 0.0
    %900 = vmatpush.xpose.msra.mxu0 0.0
    %901 = vmatpush.xpose.msra.mxu0 %v887
    %902 = vmatpush.xpose.msra.mxu0 %v884
    %903 = vmatpush.xpose.msra.mxu0 %v881
    %904 = vmatpush.xpose.msra.mxu0 %v878
    %905 = vmatmul.f32.gmra.mxu0 %v872
    %v906 = vpop.f32.mrf.mxu0
    %v907 = vadd.f32 %v869, %v906
    %908 = vmatmul.f32.gmra.mxu0 %v875
    %v909 = vpop.f32.mrf.mxu0
    %v910 = vadd.f32 %v869, %v909
    %911 = vdwg.mxu0
    %912 = vst.msk [vmem:[#allocation3] sm:$0xff] %vm48, %v907
    %913 = vst.msk [vmem:[#allocation3 + $0x8] sm:$0xff] %vm48, %v910
    // Predicated region
    $region30: #{tpu_custom_call.1} parent=1 // pred_check
      _
    $region31: #{tpu_custom_call.1} parent=1 // pred_check_branch
      %915 = sbr.rel (0) target = $region33
    $region32: #{tpu_custom_call.1} parent=1 // pred_region
      %917 = vsyncadd [#allocation4], 0
      %s918 = sshll.u32 [#allocation3], 4
      %s919 = int_to_ptr.vmem [resolvable:$true] %s918
      %s920 = sshll.u32 %s7, 4
      %s921 = int_to_ptr.hbm [resolvable:$true] %s920
      %926 = dma.vmem_to_hbm [thread:$0]  %s919, 256, %s921, [#allocation4], 128, 128, 8
    $region33: #{tpu_custom_call.1} parent=1 // pred_fallthru
      _
    // Predicated region
    $region34: #{tpu_custom_call.1} parent=1 // pred_check
      _
    $region35: #{tpu_custom_call.1} parent=1 // pred_check_branch
      %928 = sbr.rel (0) target = $region37
    $region36: #{tpu_custom_call.1} parent=1 // pred_region
      %930 = vsyncadd [#allocation6], 0
      %s931 = sshll.u32 [#allocation5], 4
      %s932 = int_to_ptr.vmem [resolvable:$true] %s931
      %s933 = sshll.u32 %s8, 4
      %s934 = int_to_ptr.hbm [resolvable:$true] %s933
      %939 = dma.vmem_to_hbm [thread:$0]  %s932, 1024, %s934, [#allocation6], 128, 128, 8
    $region37: #{tpu_custom_call.1} parent=1 // pred_fallthru
      _
    // Predicated region
    $region38: #{tpu_custom_call.1} parent=1 // pred_check
      _
    $region39: #{tpu_custom_call.1} parent=1 // pred_check_branch
      %941 = sbr.rel (0) target = $region41
    $region40: #{tpu_custom_call.1} parent=1 // pred_region
      %943 = dma.done [#allocation4], 256
    $region41: #{tpu_custom_call.1} parent=1 // pred_fallthru
      _
    // Predicated region
    $region42: #{tpu_custom_call.1} parent=1 // pred_check
      _
    $region43: #{tpu_custom_call.1} parent=1 // pred_check_branch
      %945 = sbr.rel (0) target = $region45
    $region44: #{tpu_custom_call.1} parent=1 // pred_region
      %947 = dma.done [#allocation6], 1024
    $region45: #{tpu_custom_call.1} parent=1 // pred_fallthru
      _
    %948 = vsyncpa [#allocation4], 1
    %949 = vsyncpa [#allocation6], 1

</llo_original>
